<compile_context>
chip_gen: v6e
topology: v6e:2x2x1
jax: 0.10.0
libtpu: 0.0.40
codegen_flags: <defaults>
</compile_context>

<pallas_src>
import functools

import jax
import jax.numpy as jnp
import numpy as np
from jax.experimental import pallas as pl
from jax.experimental.pallas import tpu as pltpu


def _margin_sum(labels_ref, classes_ref):
    """sum_{b,c} [ y*relu(0.9-|v|)^2 + 0.5*(1-y)*relu(|v|-0.1)^2 ]  -> f32 scalar."""
    v = classes_ref[...].astype(jnp.float32)            # (B, C, Dc)
    lengths = jnp.sqrt(jnp.sum(v * v, axis=-1))         # (B, C)
    lab = labels_ref[...].astype(jnp.float32)           # (B, C)
    left = jnp.maximum(0.9 - lengths, 0.0)
    right = jnp.maximum(lengths - 0.1, 0.0)
    margin = lab * (left * left) + 0.5 * (1.0 - lab) * (right * right)
    return jnp.sum(margin)


def _margin_recon_kernel(labels_ref, classes_ref, img_ref, rec_ref,
                         out_ref, acc_ref, *, rl, inv_batch):
    s = pl.program_id(0)   # parallel split axis (one per TensorCore on v7x)
    t = pl.program_id(1)   # reduction (row-tile) axis

    @pl.when(t == 0)
    def _init():
        acc_ref[...] = jnp.zeros_like(acc_ref)

    # Per-tile reconstruction SSE: cast to f32 per tile, accumulate in f32.
    diff = rec_ref[...].astype(jnp.float32) - img_ref[...].astype(jnp.float32)
    acc_ref[...] += jnp.float32(rl) * jnp.sum(diff * diff)

    # Margin loss is tiny (B x C x Dc); compute once, hidden under the DMA.
    @pl.when(jnp.logical_and(s == 0, t == 0))
    def _margin():
        acc_ref[...] += _margin_sum(labels_ref, classes_ref)

    @pl.when(t == pl.num_programs(1) - 1)
    def _finalize():
        out_ref[...] = acc_ref[...] * jnp.float32(inv_batch)


def _margin_only_kernel(labels_ref, classes_ref, out_ref, *, inv_batch):
    total = _margin_sum(labels_ref, classes_ref) * jnp.float32(inv_batch)
    out_ref[...] = jnp.full((1, 1), total, dtype=jnp.float32)


def capsule_loss_margin_loss(labels, classes, images, reconstructions,
                             *, reconstruction=True, rl=0.0005):
    """Pallas implementation of CapsuleLossMarginLoss.forward.

    labels:          (B, C) float targets (one-hot)
    classes:         (B, C, Dc) capsule output vectors (norm taken over Dc)
    images:          NCHW (B, Ci, H, W)
    reconstructions: any shape with the same number of elements as images
    """
    B = images.shape[0]
    inv_batch = 1.0 / float(B)

    if not reconstruction:
        # Margin-only path: never DMA images/reconstructions (no wasted bandwidth).
        out = pl.pallas_call(
            functools.partial(_margin_only_kernel, inv_batch=inv_batch),
            out_shape=jax.ShapeDtypeStruct((1, 1), jnp.float32),
            in_specs=[pl.BlockSpec(memory_space=pltpu.VMEM),
                      pl.BlockSpec(memory_space=pltpu.VMEM)],
            out_specs=pl.BlockSpec(memory_space=pltpu.VMEM),
        )(labels, classes)
        return out[0, 0]

    assert images.size == reconstructions.size

    D = int(np.prod(images.shape[1:]))
    Dp = ((D + 127) // 128) * 128                 # lane-dense (multiple of 128)

    itemsize = max(images.dtype.itemsize, reconstructions.dtype.itemsize)
    # Target ~4 MiB per input tile -> 2 inputs x 2 pipeline buffers ~= 16 MiB VMEM,
    # comfortably under the explicit 32 MiB limit (safe on v5e/v6e/v7x).
    target_tile_bytes = 4 * 1024 * 1024
    tile_b = (target_tile_bytes // max(1, Dp * itemsize)) // 8 * 8
    tile_b = int(max(8, min(512, tile_b)))

    num_tiles = -(-B // tile_b)
    nsplit = 2 if num_tiles >= 2 else 1           # v7x: one split per TensorCore
    t_steps = -(-num_tiles // nsplit)
    Bp = nsplit * t_steps * tile_b                # padded row count (zero rows: SSE += 0)

    # Keep native dtype on the wire; cast happens per-tile inside the kernel.
    img2d = images.reshape(B, D)
    rec2d = reconstructions.reshape(B, D)
    if (Bp - B) or (Dp - D):
        img2d = jnp.pad(img2d, ((0, Bp - B), (0, Dp - D)))
        rec2d = jnp.pad(rec2d, ((0, Bp - B), (0, Dp - D)))

    kernel = functools.partial(_margin_recon_kernel, rl=float(rl), inv_batch=inv_batch)

    grid_spec = pltpu.PrefetchScalarGridSpec(
        num_scalar_prefetch=0,
        grid=(nsplit, t_steps),
        in_specs=[
            # Small, untiled operands: same block every step (stays resident).
            pl.BlockSpec(labels.shape, lambda s, t: (0, 0)),
            pl.BlockSpec(classes.shape, lambda s, t: (0, 0, 0)),
            # Pipelined row tiles of the flattened image / reconstruction slabs.
            pl.BlockSpec((tile_b, Dp), lambda s, t: (s * t_steps + t, 0)),
            pl.BlockSpec((tile_b, Dp), lambda s, t: (s * t_steps + t, 0)),
        ],
        # One aligned (8,128) partial-result block per split.
        out_specs=pl.BlockSpec((8, 128), lambda s, t: (s, 0)),
        scratch_shapes=[pltpu.VMEM((8, 128), jnp.float32)],
    )

    out = pl.pallas_call(
        kernel,
        out_shape=jax.ShapeDtypeStruct((nsplit * 8, 128), jnp.float32),
        grid_spec=grid_spec,
        compiler_params=pltpu.CompilerParams(
            dimension_semantics=("parallel", "arbitrary"),
            vmem_limit_bytes=32 * 1024 * 1024,
        ),
    )(labels, classes, img2d, rec2d)

    # Each split's (8,128) block is filled with its partial; pick one element per block.
    return jnp.sum(out[0::8, 0])


def _reference(labels, classes, images, reconstructions, rl=0.0005, reconstruction=True):
    # Pure-JAX mirror of the PyTorch module.
    lengths = jnp.sqrt(jnp.sum(classes.astype(jnp.float32) ** 2, axis=2))
    left = jnp.maximum(0.9 - lengths, 0.0) ** 2
    right = jnp.maximum(lengths - 0.1, 0.0) ** 2
    lab = labels.astype(jnp.float32)
    margin = jnp.sum(lab * left + 0.5 * (1.0 - lab) * right)
    if not reconstruction:
        return margin / images.shape[0]
    diff = (reconstructions.reshape(-1).astype(jnp.float32)
            - images.reshape(-1).astype(jnp.float32))
    recon = jnp.sum(diff * diff)
    return (margin + rl * recon) / images.shape[0]


if __name__ == "__main__":
    key = jax.random.PRNGKey(0)
    k1, k2, k3, k4 = jax.random.split(key, 4)

    B, C, Dc = 2, 10, 16        # batch, num capsule classes, capsule vector dim
    Ci, H, W = 1, 16, 16        # NCHW image

    classes = jax.random.normal(k1, (B, C, Dc), dtype=jnp.float32)   # capsule outputs
    label_idx = jax.random.randint(k2, (B,), 0, C)
    labels = jax.nn.one_hot(label_idx, C, dtype=jnp.float32)
    images = jax.random.normal(k3, (B, Ci, H, W), dtype=jnp.float32)
    reconstructions = jax.random.normal(k4, (B, Ci * H * W), dtype=jnp.float32)

    # reconstruction=True path
    loss = capsule_loss_margin_loss(labels, classes, images, reconstructions,
                                    reconstruction=True)
    loss = jax.block_until_ready(loss)
    ref = _reference(labels, classes, images, reconstructions, reconstruction=True)
    np.testing.assert_allclose(np.asarray(loss), np.asarray(ref), rtol=1e-5, atol=1e-5)

    # reconstruction=False (margin-only) path
    loss2 = jax.block_until_ready(
        capsule_loss_margin_loss(labels, classes, images, reconstructions,
                                 reconstruction=False))
    ref2 = _reference(labels, classes, images, reconstructions, reconstruction=False)
    np.testing.assert_allclose(np.asarray(loss2), np.asarray(ref2), rtol=1e-5, atol=1e-5)

    print("KERNEL_OK")
</pallas_src>

<mosaic_0001>
module attributes {stable_mosaic.version = 11 : i64} {
  func.func @_margin_recon_kernel(%arg0: i32, %arg1: i32, %arg2: memref<2x10xf32, #tpu.memory_space<vmem>>, %arg3: memref<2x10x16xf32, #tpu.memory_space<vmem>>, %arg4: memref<512x256xf32, #tpu.memory_space<vmem>>, %arg5: memref<512x256xf32, #tpu.memory_space<vmem>>, %arg6: memref<8x128xf32, #tpu.memory_space<vmem>>, %arg7: memref<8x128xf32, #tpu.memory_space<vmem>>) attributes {dimension_semantics = [#tpu.dimension_semantics<parallel>, #tpu.dimension_semantics<arbitrary>], iteration_bounds = array<i64: 1, 1>, scalar_prefetch = 0 : i64, scratch_operands = 1 : i64, tpu.core_type = #tpu.core_type<tc>, window_params = [{pipeline_mode = #tpu.pipeline_mode<synchronous>, transform_indices = @transform_0, window_bounds = array<i64: 2, 10>}, {pipeline_mode = #tpu.pipeline_mode<synchronous>, transform_indices = @transform_1, window_bounds = array<i64: 2, 10, 16>}, {transform_indices = @transform_2, window_bounds = array<i64: 512, 256>}, {transform_indices = @transform_3, window_bounds = array<i64: 512, 256>}, {transform_indices = @transform_4, window_bounds = array<i64: 8, 128>}]} {
    %c0_i32 = arith.constant 0 : i32
    %0 = arith.cmpi eq, %arg1, %c0_i32 : i32
    %1 = arith.extui %0 : i1 to i32
    %c0_i32_0 = arith.constant 0 : i32
    %2 = arith.cmpi ne, %1, %c0_i32_0 : i32
    scf.if %2 {
      %cst_14 = arith.constant 0.000000e+00 : f32
      %24 = vector.broadcast %cst_14 : f32 to vector<8x128xf32>
      %c0_15 = arith.constant 0 : index
      %c0_16 = arith.constant 0 : index
      %25 = vector.load %arg7[%c0_15, %c0_16] : memref<8x128xf32, #tpu.memory_space<vmem>>, vector<8x128xf32>
      tpu.vector_store %arg7[%c0_15, %c0_16], %24 {strides = array<i32>} : memref<8x128xf32, #tpu.memory_space<vmem>>, vector<8x128xf32>,
    } else {
    }
    %c0 = arith.constant 0 : index
    %c0_1 = arith.constant 0 : index
    %3 = vector.load %arg5[%c0, %c0_1] : memref<512x256xf32, #tpu.memory_space<vmem>>, vector<512x256xf32>
    %c0_2 = arith.constant 0 : index
    %c0_3 = arith.constant 0 : index
    %4 = vector.load %arg4[%c0_2, %c0_3] : memref<512x256xf32, #tpu.memory_space<vmem>>, vector<512x256xf32>
    %5 = arith.subf %3, %4 : vector<512x256xf32>
    %c0_4 = arith.constant 0 : index
    %c0_5 = arith.constant 0 : index
    %6 = vector.load %arg7[%c0_4, %c0_5] : memref<8x128xf32, #tpu.memory_space<vmem>>, vector<8x128xf32>
    %7 = arith.mulf %5, %5 : vector<512x256xf32>
    %8 = vector.shape_cast %7 : vector<512x256xf32> to vector<1x512x256xf32>
    %cst = arith.constant dense<0.000000e+00> : vector<1xf32>
    %9 = vector.multi_reduction <add>, %8, %cst [1, 2] : vector<1x512x256xf32> to vector<1xf32>
    %10 = vector.shape_cast %9 : vector<1xf32> to vector<1x1x1xf32>
    %11 = vector.extract %10[0, 0, 0] : f32 from vector<1x1x1xf32>
    %cst_6 = arith.constant 5.000000e-04 : f32
    %12 = arith.mulf %cst_6, %11 : f32
    %13 = vector.broadcast %12 : f32 to vector<8x128xf32>
    %14 = arith.addf %6, %13 : vector<8x128xf32>
    %c0_7 = arith.constant 0 : index
    %c0_8 = arith.constant 0 : index
    %15 = vector.load %arg7[%c0_7, %c0_8] : memref<8x128xf32, #tpu.memory_space<vmem>>, vector<8x128xf32>
    tpu.vector_store %arg7[%c0_7, %c0_8], %14 {strides = array<i32>} : memref<8x128xf32, #tpu.memory_space<vmem>>, vector<8x128xf32>,
    %c0_i32_9 = arith.constant 0 : i32
    %16 = arith.cmpi eq, %arg0, %c0_i32_9 : i32
    %c0_i32_10 = arith.constant 0 : i32
    %17 = arith.cmpi eq, %arg1, %c0_i32_10 : i32
    %18 = arith.andi %16, %17 : i1
    %19 = arith.extui %18 : i1 to i32
    %c0_i32_11 = arith.constant 0 : i32
    %20 = arith.cmpi ne, %19, %c0_i32_11 : i32
    scf.if %20 {
      %c0_14 = arith.constant 0 : index
      %c0_15 = arith.constant 0 : index
      %24 = vector.load %arg7[%c0_14, %c0_15] : memref<8x128xf32, #tpu.memory_space<vmem>>, vector<8x128xf32>
      %c0_16 = arith.constant 0 : index
      %c0_17 = arith.constant 0 : index
      %c0_18 = arith.constant 0 : index
      %25 = vector.load %arg3[%c0_16, %c0_17, %c0_18] : memref<2x10x16xf32, #tpu.memory_space<vmem>>, vector<2x10x16xf32>
      %26 = arith.mulf %25, %25 : vector<2x10x16xf32>
      %cst_19 = arith.constant dense<0.000000e+00> : vector<2x10xf32>
      %27 = vector.multi_reduction <add>, %26, %cst_19 [2] : vector<2x10x16xf32> to vector<2x10xf32>
      %28 = math.sqrt %27 : vector<2x10xf32>
      %c0_20 = arith.constant 0 : index
      %c0_21 = arith.constant 0 : index
      %29 = vector.load %arg2[%c0_20, %c0_21] : memref<2x10xf32, #tpu.memory_space<vmem>>, vector<2x10xf32>
      %cst_22 = arith.constant 0.899999976 : f32
      %30 = vector.broadcast %cst_22 : f32 to vector<2x10xf32>
      %31 = arith.subf %30, %28 : vector<2x10xf32>
      %cst_23 = arith.constant 0.000000e+00 : f32
      %32 = vector.broadcast %cst_23 : f32 to vector<2x10xf32>
      %33 = arith.maximumf %31, %32 : vector<2x10xf32>
      %cst_24 = arith.constant 1.000000e-01 : f32
      %34 = vector.broadcast %cst_24 : f32 to vector<2x10xf32>
      %35 = arith.subf %28, %34 : vector<2x10xf32>
      %cst_25 = arith.constant 0.000000e+00 : f32
      %36 = vector.broadcast %cst_25 : f32 to vector<2x10xf32>
      %37 = arith.maximumf %35, %36 : vector<2x10xf32>
      %38 = arith.mulf %33, %33 : vector<2x10xf32>
      %39 = arith.mulf %29, %38 : vector<2x10xf32>
      %cst_26 = arith.constant 1.000000e+00 : f32
      %40 = vector.broadcast %cst_26 : f32 to vector<2x10xf32>
      %41 = arith.subf %40, %29 : vector<2x10xf32>
      %cst_27 = arith.constant 5.000000e-01 : f32
      %42 = vector.broadcast %cst_27 : f32 to vector<2x10xf32>
      %43 = arith.mulf %42, %41 : vector<2x10xf32>
      %44 = arith.mulf %37, %37 : vector<2x10xf32>
      %45 = arith.mulf %43, %44 : vector<2x10xf32>
      %46 = arith.addf %39, %45 : vector<2x10xf32>
      %47 = vector.shape_cast %46 : vector<2x10xf32> to vector<1x2x10xf32>
      %cst_28 = arith.constant dense<0.000000e+00> : vector<1xf32>
      %48 = vector.multi_reduction <add>, %47, %cst_28 [1, 2] : vector<1x2x10xf32> to vector<1xf32>
      %49 = vector.shape_cast %48 : vector<1xf32> to vector<1x1x1xf32>
      %50 = vector.extract %49[0, 0, 0] : f32 from vector<1x1x1xf32>
      %51 = vector.broadcast %50 : f32 to vector<8x128xf32>
      %52 = arith.addf %24, %51 : vector<8x128xf32>
      %c0_29 = arith.constant 0 : index
      %c0_30 = arith.constant 0 : index
      %53 = vector.load %arg7[%c0_29, %c0_30] : memref<8x128xf32, #tpu.memory_space<vmem>>, vector<8x128xf32>
      tpu.vector_store %arg7[%c0_29, %c0_30], %52 {strides = array<i32>} : memref<8x128xf32, #tpu.memory_space<vmem>>, vector<8x128xf32>,
    } else {
    }
    %c0_i32_12 = arith.constant 0 : i32
    %21 = arith.cmpi eq, %arg1, %c0_i32_12 : i32
    %22 = arith.extui %21 : i1 to i32
    %c0_i32_13 = arith.constant 0 : i32
    %23 = arith.cmpi ne, %22, %c0_i32_13 : i32
    scf.if %23 {
      %c0_14 = arith.constant 0 : index
      %c0_15 = arith.constant 0 : index
      %24 = vector.load %arg7[%c0_14, %c0_15] : memref<8x128xf32, #tpu.memory_space<vmem>>, vector<8x128xf32>
      %cst_16 = arith.constant 5.000000e-01 : f32
      %25 = vector.broadcast %cst_16 : f32 to vector<8x128xf32>
      %26 = arith.mulf %24, %25 : vector<8x128xf32>
      %c0_17 = arith.constant 0 : index
      %c0_18 = arith.constant 0 : index
      %27 = vector.load %arg6[%c0_17, %c0_18] : memref<8x128xf32, #tpu.memory_space<vmem>>, vector<8x128xf32>
      tpu.vector_store %arg6[%c0_17, %c0_18], %26 {strides = array<i32>} : memref<8x128xf32, #tpu.memory_space<vmem>>, vector<8x128xf32>,
    } else {
    }
    return
  }
  func.func @transform_0(%arg0: i32, %arg1: i32) -> (i32, i32) {
    %c0_i32 = arith.constant 0 : i32
    %c0_i32_0 = arith.constant 0 : i32
    %c0_i32_1 = arith.constant 0 : i32
    return %c0_i32, %c0_i32_0 : i32, i32
  }
  func.func @transform_1(%arg0: i32, %arg1: i32) -> (i32, i32, i32) {
    %c0_i32 = arith.constant 0 : i32
    %c0_i32_0 = arith.constant 0 : i32
    %c0_i32_1 = arith.constant 0 : i32
    %c0_i32_2 = arith.constant 0 : i32
    return %c0_i32, %c0_i32_0, %c0_i32_1 : i32, i32, i32
  }
  func.func @transform_2(%arg0: i32, %arg1: i32) -> (i32, i32) {
    %c1_i32 = arith.constant 1 : i32
    %0 = arith.muli %arg0, %c1_i32 : i32
    %1 = arith.addi %0, %arg1 : i32
    %c0_i32 = arith.constant 0 : i32
    %c0_i32_0 = arith.constant 0 : i32
    return %1, %c0_i32 : i32, i32
  }
  func.func @transform_3(%arg0: i32, %arg1: i32) -> (i32, i32) {
    %c1_i32 = arith.constant 1 : i32
    %0 = arith.muli %arg0, %c1_i32 : i32
    %1 = arith.addi %0, %arg1 : i32
    %c0_i32 = arith.constant 0 : i32
    %c0_i32_0 = arith.constant 0 : i32
    return %1, %c0_i32 : i32, i32
  }
  func.func @transform_4(%arg0: i32, %arg1: i32) -> (i32, i32) {
    %c0_i32 = arith.constant 0 : i32
    %c0_i32_0 = arith.constant 0 : i32
    return %arg0, %c0_i32 : i32, i32
  }
}

</mosaic_0001>

<llo_original>
// kernel: tpu_custom_call.1
$region0: #{tpu_custom_call.1}
  #allocation0 [shape = 'u32[]', space=smem, size = 0x4, offset = 0x4, fixed_abs, tag = 'smem constant byte address 0x4 - core index']
  #allocation1 [shape = 'u32[144,128]{1,0:T(1,128)}', space=vmem, size = 0x12000, scoped, tag = 'internal scratch']
  #allocation2 [shape = 'f32[8,128]{1,0:T(8,128)}', space=vmem, size = 0x1000, scoped, tag = 'scratch operand']
  %s0 = inlined_call_operand.vmem [shape: f32[2,10], index: 0, kind: input, shape index: {}]
  %s1 = inlined_call_operand.vmem [shape: f32[2,10,16], index: 1, kind: input, shape index: {}]
  %s2 = inlined_call_operand.hbm [shape: f32[512,256], index: 2, kind: input, shape index: {}]
  %s3 = inlined_call_operand.hbm [shape: f32[512,256], index: 3, kind: input, shape index: {}]
  %s4 = inlined_call_operand.hbm [shape: f32[8,128], index: 4, kind: output, shape index: {}]
  %s5 = sld [smem:[#allocation0]]
  $region46: #{tpu_custom_call.1} parent=0
    _
  %s7 = ssub.s32 1, %s5
  %s8 = scalar_select 0, %s7, %s5
  $region1: #{tpu_custom_call.1} parent=0
    #allocation3 [shape = 'u8[524288]{0}', space=vmem, size = 0x80000, scoped, tag = 'input window, operand 2, single buffered']
    #allocation4 [shape = 's32[1]{0}', space=sflag, size = 0x4, scoped, tag = 'scoped memory for tpu_custom_call.1']
    #allocation5 [shape = 's32[1]{0}', space=sflag, size = 0x4, scoped, tag = 'scoped memory for tpu_custom_call.1']
    #allocation6 [shape = 'u8[524288]{0}', space=vmem, size = 0x80000, scoped, tag = 'input window, operand 3, single buffered']
    #allocation7 [shape = 's32[1]{0}', space=sflag, size = 0x4, scoped, tag = 'scoped memory for tpu_custom_call.1']
    #allocation8 [shape = 'u8[4096]{0}', space=vmem, size = 0x1000, scoped, tag = 'output window, operand 0, single buffered']
    %9 = vsyncpa [#allocation4], 0
    %10 = vsyncpa [#allocation7], 0
    %11 = vsyncpa [#allocation5], 0
    // Predicated region
    $region2: #{tpu_custom_call.1} parent=1 // pred_check
      _
    $region3: #{tpu_custom_call.1} parent=1 // pred_check_branch
      %13 = sbr.rel (0) target = $region5
    $region4: #{tpu_custom_call.1} parent=1 // pred_region
      _
    $region5: #{tpu_custom_call.1} parent=1 // pred_fallthru
      _
    // Predicated region
    $region6: #{tpu_custom_call.1} parent=1 // pred_check
      _
    $region7: #{tpu_custom_call.1} parent=1 // pred_check_branch
      %15 = sbr.rel (0) target = $region9
    $region8: #{tpu_custom_call.1} parent=1 // pred_region
      _
    $region9: #{tpu_custom_call.1} parent=1 // pred_fallthru
      _
    // Predicated region
    $region10: #{tpu_custom_call.1} parent=1 // pred_check
      _
    $region11: #{tpu_custom_call.1} parent=1 // pred_check_branch
      %17 = sbr.rel (0) target = $region13
    $region12: #{tpu_custom_call.1} parent=1 // pred_region
      %s18 = sadd.s32 0, 0
      %s19 = smul.u32 64, %s18
      %s21 = ssub.s32 16384, 16384
      %22 = vsyncadd [#allocation4], %s21
      %s23 = smul.addr %s19, 2
      %s24 = smul.addr %s23, 128
      %s25 = scalar_lea.hbm %s2, %s24
      %s26 = sshll.u32 [#allocation3], 4
      %s27 = int_to_ptr.vmem [resolvable:$true] %s26
      %32 = dma.hbm_to_vmem [thread:$0]  %s25, 16384, %s27, [#allocation4], 256, 256, 16
    $region13: #{tpu_custom_call.1} parent=1 // pred_fallthru
      _
    // Predicated region
    $region14: #{tpu_custom_call.1} parent=1 // pred_check
      _
    $region15: #{tpu_custom_call.1} parent=1 // pred_check_branch
      %34 = sbr.rel (0) target = $region17
    $region16: #{tpu_custom_call.1} parent=1 // pred_region
      %s35 = sadd.s32 0, 0
      %s36 = smul.u32 64, %s35
      %s38 = ssub.s32 16384, 16384
      %39 = vsyncadd [#allocation7], %s38
      %s40 = smul.addr %s36, 2
      %s41 = smul.addr %s40, 128
      %s42 = scalar_lea.hbm %s3, %s41
      %s43 = sshll.u32 [#allocation6], 4
      %s44 = int_to_ptr.vmem [resolvable:$true] %s43
      %49 = dma.hbm_to_vmem [thread:$0]  %s42, 16384, %s44, [#allocation7], 256, 256, 16
    $region17: #{tpu_custom_call.1} parent=1 // pred_fallthru
      _
    // Predicated region
    $region18: #{tpu_custom_call.1} parent=1 // pred_check
      _
    $region19: #{tpu_custom_call.1} parent=1 // pred_check_branch
      %51 = sbr.rel (0) target = $region21
    $region20: #{tpu_custom_call.1} parent=1 // pred_region
      %52 = dma.done [#allocation4], 16384
    $region21: #{tpu_custom_call.1} parent=1 // pred_fallthru
      _
    // Predicated region
    $region22: #{tpu_custom_call.1} parent=1 // pred_check
      _
    $region23: #{tpu_custom_call.1} parent=1 // pred_check_branch
      %54 = sbr.rel (0) target = $region25
    $region24: #{tpu_custom_call.1} parent=1 // pred_region
      %55 = dma.done [#allocation7], 16384
    $region25: #{tpu_custom_call.1} parent=1 // pred_fallthru
      _
    %s56 = sadd.s32 0, 0
    %s57 = smul.u32 64, %s56
    %s58 = sadd.s32 0, 0
    %s59 = smul.u32 64, %s58
    %p60 = scmp.eq.s32.totalorder 0, 0
    // Predicated region
    $region26: #{tpu_custom_call.1} parent=1 // pred_check
      %p61 = pneg %p60
    $region27: #{tpu_custom_call.1} parent=1 // pred_check_branch
      %63 = sbr.rel (%p61) target = $region29
    $region28: #{tpu_custom_call.1} parent=1 // pred_region
      %64 = vst [vmem:[#allocation2] sm:$0xff] 0.0
    $region29: #{tpu_custom_call.1} parent=1 // pred_fallthru
      _
    %v65 = vld [vmem:[#allocation6] sm:$0xff]
    %v66 = vld [vmem:[#allocation6 + $0x8] sm:$0xff]
    %v67 = vld [vmem:[#allocation6 + $0x10] sm:$0xff]
    %v68 = vld [vmem:[#allocation6 + $0x18] sm:$0xff]
    %v69 = vld [vmem:[#allocation6 + $0x20] sm:$0xff]
    %v70 = vld [vmem:[#allocation6 + $0x28] sm:$0xff]
    %v71 = vld [vmem:[#allocation6 + $0x30] sm:$0xff]
    %v72 = vld [vmem:[#allocation6 + $0x38] sm:$0xff]
    %v73 = vld [vmem:[#allocation6 + $0x40] sm:$0xff]
    %v74 = vld [vmem:[#allocation6 + $0x48] sm:$0xff]
    %v75 = vld [vmem:[#allocation6 + $0x50] sm:$0xff]
    %v76 = vld [vmem:[#allocation6 + $0x58] sm:$0xff]
    %v77 = vld [vmem:[#allocation6 + $0x60] sm:$0xff]
    %v78 = vld [vmem:[#allocation6 + $0x68] sm:$0xff]
    %v79 = vld [vmem:[#allocation6 + $0x70] sm:$0xff]
    %v80 = vld [vmem:[#allocation6 + $0x78] sm:$0xff]
    %v81 = vld [vmem:[#allocation6 + $0x80] sm:$0xff]
    %v82 = vld [vmem:[#allocation6 + $0x88] sm:$0xff]
    %v83 = vld [vmem:[#allocation6 + $0x90] sm:$0xff]
    %v84 = vld [vmem:[#allocation6 + $0x98] sm:$0xff]
    %v85 = vld [vmem:[#allocation6 + $0xa0] sm:$0xff]
    %v86 = vld [vmem:[#allocation6 + $0xa8] sm:$0xff]
    %v87 = vld [vmem:[#allocation6 + $0xb0] sm:$0xff]
    %v88 = vld [vmem:[#allocation6 + $0xb8] sm:$0xff]
    %v89 = vld [vmem:[#allocation6 + $0xc0] sm:$0xff]
    %v90 = vld [vmem:[#allocation6 + $0xc8] sm:$0xff]
    %v91 = vld [vmem:[#allocation6 + $0xd0] sm:$0xff]
    %v92 = vld [vmem:[#allocation6 + $0xd8] sm:$0xff]
    %v93 = vld [vmem:[#allocation6 + $0xe0] sm:$0xff]
    %v94 = vld [vmem:[#allocation6 + $0xe8] sm:$0xff]
    %v95 = vld [vmem:[#allocation6 + $0xf0] sm:$0xff]
    %v96 = vld [vmem:[#allocation6 + $0xf8] sm:$0xff]
    %v97 = vld [vmem:[#allocation6 + $0x100] sm:$0xff]
    %v98 = vld [vmem:[#allocation6 + $0x108] sm:$0xff]
    %v99 = vld [vmem:[#allocation6 + $0x110] sm:$0xff]
    %v100 = vld [vmem:[#allocation6 + $0x118] sm:$0xff]
    %v101 = vld [vmem:[#allocation6 + $0x120] sm:$0xff]
    %v102 = vld [vmem:[#allocation6 + $0x128] sm:$0xff]
    %v103 = vld [vmem:[#allocation6 + $0x130] sm:$0xff]
    %v104 = vld [vmem:[#allocation6 + $0x138] sm:$0xff]
    %v105 = vld [vmem:[#allocation6 + $0x140] sm:$0xff]
    %v106 = vld [vmem:[#allocation6 + $0x148] sm:$0xff]
    %v107 = vld [vmem:[#allocation6 + $0x150] sm:$0xff]
    %v108 = vld [vmem:[#allocation6 + $0x158] sm:$0xff]
    %v109 = vld [vmem:[#allocation6 + $0x160] sm:$0xff]
    %v110 = vld [vmem:[#allocation6 + $0x168] sm:$0xff]
    %v111 = vld [vmem:[#allocation6 + $0x170] sm:$0xff]
    %v112 = vld [vmem:[#allocation6 + $0x178] sm:$0xff]
    %v113 = vld [vmem:[#allocation6 + $0x180] sm:$0xff]
    %v114 = vld [vmem:[#allocation6 + $0x188] sm:$0xff]
    %v115 = vld [vmem:[#allocation6 + $0x190] sm:$0xff]
    %v116 = vld [vmem:[#allocation6 + $0x198] sm:$0xff]
    %v117 = vld [vmem:[#allocation6 + $0x1a0] sm:$0xff]
    %v118 = vld [vmem:[#allocation6 + $0x1a8] sm:$0xff]
    %v119 = vld [vmem:[#allocation6 + $0x1b0] sm:$0xff]
    %v120 = vld [vmem:[#allocation6 + $0x1b8] sm:$0xff]
    %v121 = vld [vmem:[#allocation6 + $0x1c0] sm:$0xff]
    %v122 = vld [vmem:[#allocation6 + $0x1c8] sm:$0xff]
    %v123 = vld [vmem:[#allocation6 + $0x1d0] sm:$0xff]
    %v124 = vld [vmem:[#allocation6 + $0x1d8] sm:$0xff]
    %v125 = vld [vmem:[#allocation6 + $0x1e0] sm:$0xff]
    %v126 = vld [vmem:[#allocation6 + $0x1e8] sm:$0xff]
    %v127 = vld [vmem:[#allocation6 + $0x1f0] sm:$0xff]
    %v128 = vld [vmem:[#allocation6 + $0x1f8] sm:$0xff]
    %v129 = vld [vmem:[#allocation6 + $0x200] sm:$0xff]
    %v130 = vld [vmem:[#allocation6 + $0x208] sm:$0xff]
    %v131 = vld [vmem:[#allocation6 + $0x210] sm:$0xff]
    %v132 = vld [vmem:[#allocation6 + $0x218] sm:$0xff]
    %v133 = vld [vmem:[#allocation6 + $0x220] sm:$0xff]
    %v134 = vld [vmem:[#allocation6 + $0x228] sm:$0xff]
    %v135 = vld [vmem:[#allocation6 + $0x230] sm:$0xff]
    %v136 = vld [vmem:[#allocation6 + $0x238] sm:$0xff]
    %v137 = vld [vmem:[#allocation6 + $0x240] sm:$0xff]
    %v138 = vld [vmem:[#allocation6 + $0x248] sm:$0xff]
    %v139 = vld [vmem:[#allocation6 + $0x250] sm:$0xff]
    %v140 = vld [vmem:[#allocation6 + $0x258] sm:$0xff]
    %v141 = vld [vmem:[#allocation6 + $0x260] sm:$0xff]
    %v142 = vld [vmem:[#allocation6 + $0x268] sm:$0xff]
    %v143 = vld [vmem:[#allocation6 + $0x270] sm:$0xff]
    %v144 = vld [vmem:[#allocation6 + $0x278] sm:$0xff]
    %v145 = vld [vmem:[#allocation6 + $0x280] sm:$0xff]
    %v146 = vld [vmem:[#allocation6 + $0x288] sm:$0xff]
    %v147 = vld [vmem:[#allocation6 + $0x290] sm:$0xff]
    %v148 = vld [vmem:[#allocation6 + $0x298] sm:$0xff]
    %v149 = vld [vmem:[#allocation6 + $0x2a0] sm:$0xff]
    %v150 = vld [vmem:[#allocation6 + $0x2a8] sm:$0xff]
    %v151 = vld [vmem:[#allocation6 + $0x2b0] sm:$0xff]
    %v152 = vld [vmem:[#allocation6 + $0x2b8] sm:$0xff]
    %v153 = vld [vmem:[#allocation6 + $0x2c0] sm:$0xff]
    %v154 = vld [vmem:[#allocation6 + $0x2c8] sm:$0xff]
    %v155 = vld [vmem:[#allocation6 + $0x2d0] sm:$0xff]
    %v156 = vld [vmem:[#allocation6 + $0x2d8] sm:$0xff]
    %v157 = vld [vmem:[#allocation6 + $0x2e0] sm:$0xff]
    %v158 = vld [vmem:[#allocation6 + $0x2e8] sm:$0xff]
    %v159 = vld [vmem:[#allocation6 + $0x2f0] sm:$0xff]
    %v160 = vld [vmem:[#allocation6 + $0x2f8] sm:$0xff]
    %v161 = vld [vmem:[#allocation6 + $0x300] sm:$0xff]
    %v162 = vld [vmem:[#allocation6 + $0x308] sm:$0xff]
    %v163 = vld [vmem:[#allocation6 + $0x310] sm:$0xff]
    %v164 = vld [vmem:[#allocation6 + $0x318] sm:$0xff]
    %v165 = vld [vmem:[#allocation6 + $0x320] sm:$0xff]
    %v166 = vld [vmem:[#allocation6 + $0x328] sm:$0xff]
    %v167 = vld [vmem:[#allocation6 + $0x330] sm:$0xff]
    %v168 = vld [vmem:[#allocation6 + $0x338] sm:$0xff]
    %v169 = vld [vmem:[#allocation6 + $0x340] sm:$0xff]
    %v170 = vld [vmem:[#allocation6 + $0x348] sm:$0xff]
    %v171 = vld [vmem:[#allocation6 + $0x350] sm:$0xff]
    %v172 = vld [vmem:[#allocation6 + $0x358] sm:$0xff]
    %v173 = vld [vmem:[#allocation6 + $0x360] sm:$0xff]
    %v174 = vld [vmem:[#allocation6 + $0x368] sm:$0xff]
    %v175 = vld [vmem:[#allocation6 + $0x370] sm:$0xff]
    %v176 = vld [vmem:[#allocation6 + $0x378] sm:$0xff]
    %v177 = vld [vmem:[#allocation6 + $0x380] sm:$0xff]
    %v178 = vld [vmem:[#allocation6 + $0x388] sm:$0xff]
    %v179 = vld [vmem:[#allocation6 + $0x390] sm:$0xff]
    %v180 = vld [vmem:[#allocation6 + $0x398] sm:$0xff]
    %v181 = vld [vmem:[#allocation6 + $0x3a0] sm:$0xff]
    %v182 = vld [vmem:[#allocation6 + $0x3a8] sm:$0xff]
    %v183 = vld [vmem:[#allocation6 + $0x3b0] sm:$0xff]
    %v184 = vld [vmem:[#allocation6 + $0x3b8] sm:$0xff]
    %v185 = vld [vmem:[#allocation6 + $0x3c0] sm:$0xff]
    %v186 = vld [vmem:[#allocation6 + $0x3c8] sm:$0xff]
    %v187 = vld [vmem:[#allocation6 + $0x3d0] sm:$0xff]
    %v188 = vld [vmem:[#allocation6 + $0x3d8] sm:$0xff]
    %v189 = vld [vmem:[#allocation6 + $0x3e0] sm:$0xff]
    %v190 = vld [vmem:[#allocation6 + $0x3e8] sm:$0xff]
    %v191 = vld [vmem:[#allocation6 + $0x3f0] sm:$0xff]
    %v192 = vld [vmem:[#allocation6 + $0x3f8] sm:$0xff]
    %v193 = vld [vmem:[#allocation3] sm:$0xff]
    %v194 = vld [vmem:[#allocation3 + $0x8] sm:$0xff]
    %v195 = vld [vmem:[#allocation3 + $0x10] sm:$0xff]
    %v196 = vld [vmem:[#allocation3 + $0x18] sm:$0xff]
    %v197 = vld [vmem:[#allocation3 + $0x20] sm:$0xff]
    %v198 = vld [vmem:[#allocation3 + $0x28] sm:$0xff]
    %v199 = vld [vmem:[#allocation3 + $0x30] sm:$0xff]
    %v200 = vld [vmem:[#allocation3 + $0x38] sm:$0xff]
    %v201 = vld [vmem:[#allocation3 + $0x40] sm:$0xff]
    %v202 = vld [vmem:[#allocation3 + $0x48] sm:$0xff]
    %v203 = vld [vmem:[#allocation3 + $0x50] sm:$0xff]
    %v204 = vld [vmem:[#allocation3 + $0x58] sm:$0xff]
    %v205 = vld [vmem:[#allocation3 + $0x60] sm:$0xff]
    %v206 = vld [vmem:[#allocation3 + $0x68] sm:$0xff]
    %v207 = vld [vmem:[#allocation3 + $0x70] sm:$0xff]
    %v208 = vld [vmem:[#allocation3 + $0x78] sm:$0xff]
    %v209 = vld [vmem:[#allocation3 + $0x80] sm:$0xff]
    %v210 = vld [vmem:[#allocation3 + $0x88] sm:$0xff]
    %v211 = vld [vmem:[#allocation3 + $0x90] sm:$0xff]
    %v212 = vld [vmem:[#allocation3 + $0x98] sm:$0xff]
    %v213 = vld [vmem:[#allocation3 + $0xa0] sm:$0xff]
    %v214 = vld [vmem:[#allocation3 + $0xa8] sm:$0xff]
    %v215 = vld [vmem:[#allocation3 + $0xb0] sm:$0xff]
    %v216 = vld [vmem:[#allocation3 + $0xb8] sm:$0xff]
    %v217 = vld [vmem:[#allocation3 + $0xc0] sm:$0xff]
    %v218 = vld [vmem:[#allocation3 + $0xc8] sm:$0xff]
    %v219 = vld [vmem:[#allocation3 + $0xd0] sm:$0xff]
    %v220 = vld [vmem:[#allocation3 + $0xd8] sm:$0xff]
    %v221 = vld [vmem:[#allocation3 + $0xe0] sm:$0xff]
    %v222 = vld [vmem:[#allocation3 + $0xe8] sm:$0xff]
    %v223 = vld [vmem:[#allocation3 + $0xf0] sm:$0xff]
    %v224 = vld [vmem:[#allocation3 + $0xf8] sm:$0xff]
    %v225 = vld [vmem:[#allocation3 + $0x100] sm:$0xff]
    %v226 = vld [vmem:[#allocation3 + $0x108] sm:$0xff]
    %v227 = vld [vmem:[#allocation3 + $0x110] sm:$0xff]
    %v228 = vld [vmem:[#allocation3 + $0x118] sm:$0xff]
    %v229 = vld [vmem:[#allocation3 + $0x120] sm:$0xff]
    %v230 = vld [vmem:[#allocation3 + $0x128] sm:$0xff]
    %v231 = vld [vmem:[#allocation3 + $0x130] sm:$0xff]
    %v232 = vld [vmem:[#allocation3 + $0x138] sm:$0xff]
    %v233 = vld [vmem:[#allocation3 + $0x140] sm:$0xff]
    %v234 = vld [vmem:[#allocation3 + $0x148] sm:$0xff]
    %v235 = vld [vmem:[#allocation3 + $0x150] sm:$0xff]
    %v236 = vld [vmem:[#allocation3 + $0x158] sm:$0xff]
    %v237 = vld [vmem:[#allocation3 + $0x160] sm:$0xff]
    %v238 = vld [vmem:[#allocation3 + $0x168] sm:$0xff]
    %v239 = vld [vmem:[#allocation3 + $0x170] sm:$0xff]
    %v240 = vld [vmem:[#allocation3 + $0x178] sm:$0xff]
    %v241 = vld [vmem:[#allocation3 + $0x180] sm:$0xff]
    %v242 = vld [vmem:[#allocation3 + $0x188] sm:$0xff]
    %v243 = vld [vmem:[#allocation3 + $0x190] sm:$0xff]
    %v244 = vld [vmem:[#allocation3 + $0x198] sm:$0xff]
    %v245 = vld [vmem:[#allocation3 + $0x1a0] sm:$0xff]
    %v246 = vld [vmem:[#allocation3 + $0x1a8] sm:$0xff]
    %v247 = vld [vmem:[#allocation3 + $0x1b0] sm:$0xff]
    %v248 = vld [vmem:[#allocation3 + $0x1b8] sm:$0xff]
    %v249 = vld [vmem:[#allocation3 + $0x1c0] sm:$0xff]
    %v250 = vld [vmem:[#allocation3 + $0x1c8] sm:$0xff]
    %v251 = vld [vmem:[#allocation3 + $0x1d0] sm:$0xff]
    %v252 = vld [vmem:[#allocation3 + $0x1d8] sm:$0xff]
    %v253 = vld [vmem:[#allocation3 + $0x1e0] sm:$0xff]
    %v254 = vld [vmem:[#allocation3 + $0x1e8] sm:$0xff]
    %v255 = vld [vmem:[#allocation3 + $0x1f0] sm:$0xff]
    %v256 = vld [vmem:[#allocation3 + $0x1f8] sm:$0xff]
    %v257 = vld [vmem:[#allocation3 + $0x200] sm:$0xff]
    %v258 = vld [vmem:[#allocation3 + $0x208] sm:$0xff]
    %v259 = vld [vmem:[#allocation3 + $0x210] sm:$0xff]
    %v260 = vld [vmem:[#allocation3 + $0x218] sm:$0xff]
    %v261 = vld [vmem:[#allocation3 + $0x220] sm:$0xff]
    %v262 = vld [vmem:[#allocation3 + $0x228] sm:$0xff]
    %v263 = vld [vmem:[#allocation3 + $0x230] sm:$0xff]
    %v264 = vld [vmem:[#allocation3 + $0x238] sm:$0xff]
    %v265 = vld [vmem:[#allocation3 + $0x240] sm:$0xff]
    %v266 = vld [vmem:[#allocation3 + $0x248] sm:$0xff]
    %v267 = vld [vmem:[#allocation3 + $0x250] sm:$0xff]
    %v268 = vld [vmem:[#allocation3 + $0x258] sm:$0xff]
    %v269 = vld [vmem:[#allocation3 + $0x260] sm:$0xff]
    %v270 = vld [vmem:[#allocation3 + $0x268] sm:$0xff]
    %v271 = vld [vmem:[#allocation3 + $0x270] sm:$0xff]
    %v272 = vld [vmem:[#allocation3 + $0x278] sm:$0xff]
    %v273 = vld [vmem:[#allocation3 + $0x280] sm:$0xff]
    %v274 = vld [vmem:[#allocation3 + $0x288] sm:$0xff]
    %v275 = vld [vmem:[#allocation3 + $0x290] sm:$0xff]
    %v276 = vld [vmem:[#allocation3 + $0x298] sm:$0xff]
    %v277 = vld [vmem:[#allocation3 + $0x2a0] sm:$0xff]
    %v278 = vld [vmem:[#allocation3 + $0x2a8] sm:$0xff]
    %v279 = vld [vmem:[#allocation3 + $0x2b0] sm:$0xff]
    %v280 = vld [vmem:[#allocation3 + $0x2b8] sm:$0xff]
    %v281 = vld [vmem:[#allocation3 + $0x2c0] sm:$0xff]
    %v282 = vld [vmem:[#allocation3 + $0x2c8] sm:$0xff]
    %v283 = vld [vmem:[#allocation3 + $0x2d0] sm:$0xff]
    %v284 = vld [vmem:[#allocation3 + $0x2d8] sm:$0xff]
    %v285 = vld [vmem:[#allocation3 + $0x2e0] sm:$0xff]
    %v286 = vld [vmem:[#allocation3 + $0x2e8] sm:$0xff]
    %v287 = vld [vmem:[#allocation3 + $0x2f0] sm:$0xff]
    %v288 = vld [vmem:[#allocation3 + $0x2f8] sm:$0xff]
    %v289 = vld [vmem:[#allocation3 + $0x300] sm:$0xff]
    %v290 = vld [vmem:[#allocation3 + $0x308] sm:$0xff]
    %v291 = vld [vmem:[#allocation3 + $0x310] sm:$0xff]
    %v292 = vld [vmem:[#allocation3 + $0x318] sm:$0xff]
    %v293 = vld [vmem:[#allocation3 + $0x320] sm:$0xff]
    %v294 = vld [vmem:[#allocation3 + $0x328] sm:$0xff]
    %v295 = vld [vmem:[#allocation3 + $0x330] sm:$0xff]
    %v296 = vld [vmem:[#allocation3 + $0x338] sm:$0xff]
    %v297 = vld [vmem:[#allocation3 + $0x340] sm:$0xff]
    %v298 = vld [vmem:[#allocation3 + $0x348] sm:$0xff]
    %v299 = vld [vmem:[#allocation3 + $0x350] sm:$0xff]
    %v300 = vld [vmem:[#allocation3 + $0x358] sm:$0xff]
    %v301 = vld [vmem:[#allocation3 + $0x360] sm:$0xff]
    %v302 = vld [vmem:[#allocation3 + $0x368] sm:$0xff]
    %v303 = vld [vmem:[#allocation3 + $0x370] sm:$0xff]
    %v304 = vld [vmem:[#allocation3 + $0x378] sm:$0xff]
    %v305 = vld [vmem:[#allocation3 + $0x380] sm:$0xff]
    %v306 = vld [vmem:[#allocation3 + $0x388] sm:$0xff]
    %v307 = vld [vmem:[#allocation3 + $0x390] sm:$0xff]
    %v308 = vld [vmem:[#allocation3 + $0x398] sm:$0xff]
    %v309 = vld [vmem:[#allocation3 + $0x3a0] sm:$0xff]
    %v310 = vld [vmem:[#allocation3 + $0x3a8] sm:$0xff]
    %v311 = vld [vmem:[#allocation3 + $0x3b0] sm:$0xff]
    %v312 = vld [vmem:[#allocation3 + $0x3b8] sm:$0xff]
    %v313 = vld [vmem:[#allocation3 + $0x3c0] sm:$0xff]
    %v314 = vld [vmem:[#allocation3 + $0x3c8] sm:$0xff]
    %v315 = vld [vmem:[#allocation3 + $0x3d0] sm:$0xff]
    %v316 = vld [vmem:[#allocation3 + $0x3d8] sm:$0xff]
    %v317 = vld [vmem:[#allocation3 + $0x3e0] sm:$0xff]
    %v318 = vld [vmem:[#allocation3 + $0x3e8] sm:$0xff]
    %v319 = vld [vmem:[#allocation3 + $0x3f0] sm:$0xff]
    %v320 = vld [vmem:[#allocation3 + $0x3f8] sm:$0xff]
    %v321 = vsub.f32 %v65, %v193
    %v322 = vsub.f32 %v66, %v194
    %v323 = vsub.f32 %v67, %v195
    %v324 = vsub.f32 %v68, %v196
    %v325 = vsub.f32 %v69, %v197
    %v326 = vsub.f32 %v70, %v198
    %v327 = vsub.f32 %v71, %v199
    %v328 = vsub.f32 %v72, %v200
    %v329 = vsub.f32 %v73, %v201
    %v330 = vsub.f32 %v74, %v202
    %v331 = vsub.f32 %v75, %v203
    %v332 = vsub.f32 %v76, %v204
    %v333 = vsub.f32 %v77, %v205
    %v334 = vsub.f32 %v78, %v206
    %v335 = vsub.f32 %v79, %v207
    %v336 = vsub.f32 %v80, %v208
    %v337 = vsub.f32 %v81, %v209
    %v338 = vsub.f32 %v82, %v210
    %v339 = vsub.f32 %v83, %v211
    %v340 = vsub.f32 %v84, %v212
    %v341 = vsub.f32 %v85, %v213
    %v342 = vsub.f32 %v86, %v214
    %v343 = vsub.f32 %v87, %v215
    %v344 = vsub.f32 %v88, %v216
    %v345 = vsub.f32 %v89, %v217
    %v346 = vsub.f32 %v90, %v218
    %v347 = vsub.f32 %v91, %v219
    %v348 = vsub.f32 %v92, %v220
    %v349 = vsub.f32 %v93, %v221
    %v350 = vsub.f32 %v94, %v222
    %v351 = vsub.f32 %v95, %v223
    %v352 = vsub.f32 %v96, %v224
    %v353 = vsub.f32 %v97, %v225
    %v354 = vsub.f32 %v98, %v226
    %v355 = vsub.f32 %v99, %v227
    %v356 = vsub.f32 %v100, %v228
    %v357 = vsub.f32 %v101, %v229
    %v358 = vsub.f32 %v102, %v230
    %v359 = vsub.f32 %v103, %v231
    %v360 = vsub.f32 %v104, %v232
    %v361 = vsub.f32 %v105, %v233
    %v362 = vsub.f32 %v106, %v234
    %v363 = vsub.f32 %v107, %v235
    %v364 = vsub.f32 %v108, %v236
    %v365 = vsub.f32 %v109, %v237
    %v366 = vsub.f32 %v110, %v238
    %v367 = vsub.f32 %v111, %v239
    %v368 = vsub.f32 %v112, %v240
    %v369 = vsub.f32 %v113, %v241
    %v370 = vsub.f32 %v114, %v242
    %v371 = vsub.f32 %v115, %v243
    %v372 = vsub.f32 %v116, %v244
    %v373 = vsub.f32 %v117, %v245
    %v374 = vsub.f32 %v118, %v246
    %v375 = vsub.f32 %v119, %v247
    %v376 = vsub.f32 %v120, %v248
    %v377 = vsub.f32 %v121, %v249
    %v378 = vsub.f32 %v122, %v250
    %v379 = vsub.f32 %v123, %v251
    %v380 = vsub.f32 %v124, %v252
    %v381 = vsub.f32 %v125, %v253
    %v382 = vsub.f32 %v126, %v254
    %v383 = vsub.f32 %v127, %v255
    %v384 = vsub.f32 %v128, %v256
    %v385 = vsub.f32 %v129, %v257
    %v386 = vsub.f32 %v130, %v258
    %v387 = vsub.f32 %v131, %v259
    %v388 = vsub.f32 %v132, %v260
    %v389 = vsub.f32 %v133, %v261
    %v390 = vsub.f32 %v134, %v262
    %v391 = vsub.f32 %v135, %v263
    %v392 = vsub.f32 %v136, %v264
    %v393 = vsub.f32 %v137, %v265
    %v394 = vsub.f32 %v138, %v266
    %v395 = vsub.f32 %v139, %v267
    %v396 = vsub.f32 %v140, %v268
    %v397 = vsub.f32 %v141, %v269
    %v398 = vsub.f32 %v142, %v270
    %v399 = vsub.f32 %v143, %v271
    %v400 = vsub.f32 %v144, %v272
    %v401 = vsub.f32 %v145, %v273
    %v402 = vsub.f32 %v146, %v274
    %v403 = vsub.f32 %v147, %v275
    %v404 = vsub.f32 %v148, %v276
    %v405 = vsub.f32 %v149, %v277
    %v406 = vsub.f32 %v150, %v278
    %v407 = vsub.f32 %v151, %v279
    %v408 = vsub.f32 %v152, %v280
    %v409 = vsub.f32 %v153, %v281
    %v410 = vsub.f32 %v154, %v282
    %v411 = vsub.f32 %v155, %v283
    %v412 = vsub.f32 %v156, %v284
    %v413 = vsub.f32 %v157, %v285
    %v414 = vsub.f32 %v158, %v286
    %v415 = vsub.f32 %v159, %v287
    %v416 = vsub.f32 %v160, %v288
    %v417 = vsub.f32 %v161, %v289
    %v418 = vsub.f32 %v162, %v290
    %v419 = vsub.f32 %v163, %v291
    %v420 = vsub.f32 %v164, %v292
    %v421 = vsub.f32 %v165, %v293
    %v422 = vsub.f32 %v166, %v294
    %v423 = vsub.f32 %v167, %v295
    %v424 = vsub.f32 %v168, %v296
    %v425 = vsub.f32 %v169, %v297
    %v426 = vsub.f32 %v170, %v298
    %v427 = vsub.f32 %v171, %v299
    %v428 = vsub.f32 %v172, %v300
    %v429 = vsub.f32 %v173, %v301
    %v430 = vsub.f32 %v174, %v302
    %v431 = vsub.f32 %v175, %v303
    %v432 = vsub.f32 %v176, %v304
    %v433 = vsub.f32 %v177, %v305
    %v434 = vsub.f32 %v178, %v306
    %v435 = vsub.f32 %v179, %v307
    %v436 = vsub.f32 %v180, %v308
    %v437 = vsub.f32 %v181, %v309
    %v438 = vsub.f32 %v182, %v310
    %v439 = vsub.f32 %v183, %v311
    %v440 = vsub.f32 %v184, %v312
    %v441 = vsub.f32 %v185, %v313
    %v442 = vsub.f32 %v186, %v314
    %v443 = vsub.f32 %v187, %v315
    %v444 = vsub.f32 %v188, %v316
    %v445 = vsub.f32 %v189, %v317
    %v446 = vsub.f32 %v190, %v318
    %v447 = vsub.f32 %v191, %v319
    %v448 = vsub.f32 %v192, %v320
    %v449 = vld [vmem:[#allocation2] sm:$0xff]
    %v450 = vmul.f32 %v321, %v321
    %v451 = vmul.f32 %v322, %v322
    %v452 = vmul.f32 %v323, %v323
    %v453 = vmul.f32 %v324, %v324
    %v454 = vmul.f32 %v325, %v325
    %v455 = vmul.f32 %v326, %v326
    %v456 = vmul.f32 %v327, %v327
    %v457 = vmul.f32 %v328, %v328
    %v458 = vmul.f32 %v329, %v329
    %v459 = vmul.f32 %v330, %v330
    %v460 = vmul.f32 %v331, %v331
    %v461 = vmul.f32 %v332, %v332
    %v462 = vmul.f32 %v333, %v333
    %v463 = vmul.f32 %v334, %v334
    %v464 = vmul.f32 %v335, %v335
    %v465 = vmul.f32 %v336, %v336
    %v466 = vmul.f32 %v337, %v337
    %v467 = vmul.f32 %v338, %v338
    %v468 = vmul.f32 %v339, %v339
    %v469 = vmul.f32 %v340, %v340
    %v470 = vmul.f32 %v341, %v341
    %v471 = vmul.f32 %v342, %v342
    %v472 = vmul.f32 %v343, %v343
    %v473 = vmul.f32 %v344, %v344
    %v474 = vmul.f32 %v345, %v345
    %v475 = vmul.f32 %v346, %v346
    %v476 = vmul.f32 %v347, %v347
    %v477 = vmul.f32 %v348, %v348
    %v478 = vmul.f32 %v349, %v349
    %v479 = vmul.f32 %v350, %v350
    %v480 = vmul.f32 %v351, %v351
    %v481 = vmul.f32 %v352, %v352
    %v482 = vmul.f32 %v353, %v353
    %v483 = vmul.f32 %v354, %v354
    %v484 = vmul.f32 %v355, %v355
    %v485 = vmul.f32 %v356, %v356
    %v486 = vmul.f32 %v357, %v357
    %v487 = vmul.f32 %v358, %v358
    %v488 = vmul.f32 %v359, %v359
    %v489 = vmul.f32 %v360, %v360
    %v490 = vmul.f32 %v361, %v361
    %v491 = vmul.f32 %v362, %v362
    %v492 = vmul.f32 %v363, %v363
    %v493 = vmul.f32 %v364, %v364
    %v494 = vmul.f32 %v365, %v365
    %v495 = vmul.f32 %v366, %v366
    %v496 = vmul.f32 %v367, %v367
    %v497 = vmul.f32 %v368, %v368
    %v498 = vmul.f32 %v369, %v369
    %v499 = vmul.f32 %v370, %v370
    %v500 = vmul.f32 %v371, %v371
    %v501 = vmul.f32 %v372, %v372
    %v502 = vmul.f32 %v373, %v373
    %v503 = vmul.f32 %v374, %v374
    %v504 = vmul.f32 %v375, %v375
    %v505 = vmul.f32 %v376, %v376
    %v506 = vmul.f32 %v377, %v377
    %v507 = vmul.f32 %v378, %v378
    %v508 = vmul.f32 %v379, %v379
    %v509 = vmul.f32 %v380, %v380
    %v510 = vmul.f32 %v381, %v381
    %v511 = vmul.f32 %v382, %v382
    %v512 = vmul.f32 %v383, %v383
    %v513 = vmul.f32 %v384, %v384
    %v514 = vmul.f32 %v385, %v385
    %v515 = vmul.f32 %v386, %v386
    %v516 = vmul.f32 %v387, %v387
    %v517 = vmul.f32 %v388, %v388
    %v518 = vmul.f32 %v389, %v389
    %v519 = vmul.f32 %v390, %v390
    %v520 = vmul.f32 %v391, %v391
    %v521 = vmul.f32 %v392, %v392
    %v522 = vmul.f32 %v393, %v393
    %v523 = vmul.f32 %v394, %v394
    %v524 = vmul.f32 %v395, %v395
    %v525 = vmul.f32 %v396, %v396
    %v526 = vmul.f32 %v397, %v397
    %v527 = vmul.f32 %v398, %v398
    %v528 = vmul.f32 %v399, %v399
    %v529 = vmul.f32 %v400, %v400
    %v530 = vmul.f32 %v401, %v401
    %v531 = vmul.f32 %v402, %v402
    %v532 = vmul.f32 %v403, %v403
    %v533 = vmul.f32 %v404, %v404
    %v534 = vmul.f32 %v405, %v405
    %v535 = vmul.f32 %v406, %v406
    %v536 = vmul.f32 %v407, %v407
    %v537 = vmul.f32 %v408, %v408
    %v538 = vmul.f32 %v409, %v409
    %v539 = vmul.f32 %v410, %v410
    %v540 = vmul.f32 %v411, %v411
    %v541 = vmul.f32 %v412, %v412
    %v542 = vmul.f32 %v413, %v413
    %v543 = vmul.f32 %v414, %v414
    %v544 = vmul.f32 %v415, %v415
    %v545 = vmul.f32 %v416, %v416
    %v546 = vmul.f32 %v417, %v417
    %v547 = vmul.f32 %v418, %v418
    %v548 = vmul.f32 %v419, %v419
    %v549 = vmul.f32 %v420, %v420
    %v550 = vmul.f32 %v421, %v421
    %v551 = vmul.f32 %v422, %v422
    %v552 = vmul.f32 %v423, %v423
    %v553 = vmul.f32 %v424, %v424
    %v554 = vmul.f32 %v425, %v425
    %v555 = vmul.f32 %v426, %v426
    %v556 = vmul.f32 %v427, %v427
    %v557 = vmul.f32 %v428, %v428
    %v558 = vmul.f32 %v429, %v429
    %v559 = vmul.f32 %v430, %v430
    %v560 = vmul.f32 %v431, %v431
    %v561 = vmul.f32 %v432, %v432
    %v562 = vmul.f32 %v433, %v433
    %v563 = vmul.f32 %v434, %v434
    %v564 = vmul.f32 %v435, %v435
    %v565 = vmul.f32 %v436, %v436
    %v566 = vmul.f32 %v437, %v437
    %v567 = vmul.f32 %v438, %v438
    %v568 = vmul.f32 %v439, %v439
    %v569 = vmul.f32 %v440, %v440
    %v570 = vmul.f32 %v441, %v441
    %v571 = vmul.f32 %v442, %v442
    %v572 = vmul.f32 %v443, %v443
    %v573 = vmul.f32 %v444, %v444
    %v574 = vmul.f32 %v445, %v445
    %v575 = vmul.f32 %v446, %v446
    %v576 = vmul.f32 %v447, %v447
    %v577 = vmul.f32 %v448, %v448
    %v578 = vadd.f32 %v450, %v451
    %v579 = vadd.f32 %v578, %v452
    %v580 = vadd.f32 %v579, %v453
    %v581 = vadd.f32 %v580, %v454
    %v582 = vadd.f32 %v581, %v455
    %v583 = vadd.f32 %v582, %v456
    %v584 = vadd.f32 %v583, %v457
    %v585 = vadd.f32 %v584, %v458
    %v586 = vadd.f32 %v585, %v459
    %v587 = vadd.f32 %v586, %v460
    %v588 = vadd.f32 %v587, %v461
    %v589 = vadd.f32 %v588, %v462
    %v590 = vadd.f32 %v589, %v463
    %v591 = vadd.f32 %v590, %v464
    %v592 = vadd.f32 %v591, %v465
    %v593 = vadd.f32 %v592, %v466
    %v594 = vadd.f32 %v593, %v467
    %v595 = vadd.f32 %v594, %v468
    %v596 = vadd.f32 %v595, %v469
    %v597 = vadd.f32 %v596, %v470
    %v598 = vadd.f32 %v597, %v471
    %v599 = vadd.f32 %v598, %v472
    %v600 = vadd.f32 %v599, %v473
    %v601 = vadd.f32 %v600, %v474
    %v602 = vadd.f32 %v601, %v475
    %v603 = vadd.f32 %v602, %v476
    %v604 = vadd.f32 %v603, %v477
    %v605 = vadd.f32 %v604, %v478
    %v606 = vadd.f32 %v605, %v479
    %v607 = vadd.f32 %v606, %v480
    %v608 = vadd.f32 %v607, %v481
    %v609 = vadd.f32 %v608, %v482
    %v610 = vadd.f32 %v609, %v483
    %v611 = vadd.f32 %v610, %v484
    %v612 = vadd.f32 %v611, %v485
    %v613 = vadd.f32 %v612, %v486
    %v614 = vadd.f32 %v613, %v487
    %v615 = vadd.f32 %v614, %v488
    %v616 = vadd.f32 %v615, %v489
    %v617 = vadd.f32 %v616, %v490
    %v618 = vadd.f32 %v617, %v491
    %v619 = vadd.f32 %v618, %v492
    %v620 = vadd.f32 %v619, %v493
    %v621 = vadd.f32 %v620, %v494
    %v622 = vadd.f32 %v621, %v495
    %v623 = vadd.f32 %v622, %v496
    %v624 = vadd.f32 %v623, %v497
    %v625 = vadd.f32 %v624, %v498
    %v626 = vadd.f32 %v625, %v499
    %v627 = vadd.f32 %v626, %v500
    %v628 = vadd.f32 %v627, %v501
    %v629 = vadd.f32 %v628, %v502
    %v630 = vadd.f32 %v629, %v503
    %v631 = vadd.f32 %v630, %v504
    %v632 = vadd.f32 %v631, %v505
    %v633 = vadd.f32 %v632, %v506
    %v634 = vadd.f32 %v633, %v507
    %v635 = vadd.f32 %v634, %v508
    %v636 = vadd.f32 %v635, %v509
    %v637 = vadd.f32 %v636, %v510
    %v638 = vadd.f32 %v637, %v511
    %v639 = vadd.f32 %v638, %v512
    %v640 = vadd.f32 %v639, %v513
    %v641 = vadd.f32 %v640, %v514
    %v642 = vadd.f32 %v641, %v515
    %v643 = vadd.f32 %v642, %v516
    %v644 = vadd.f32 %v643, %v517
    %v645 = vadd.f32 %v644, %v518
    %v646 = vadd.f32 %v645, %v519
    %v647 = vadd.f32 %v646, %v520
    %v648 = vadd.f32 %v647, %v521
    %v649 = vadd.f32 %v648, %v522
    %v650 = vadd.f32 %v649, %v523
    %v651 = vadd.f32 %v650, %v524
    %v652 = vadd.f32 %v651, %v525
    %v653 = vadd.f32 %v652, %v526
    %v654 = vadd.f32 %v653, %v527
    %v655 = vadd.f32 %v654, %v528
    %v656 = vadd.f32 %v655, %v529
    %v657 = vadd.f32 %v656, %v530
    %v658 = vadd.f32 %v657, %v531
    %v659 = vadd.f32 %v658, %v532
    %v660 = vadd.f32 %v659, %v533
    %v661 = vadd.f32 %v660, %v534
    %v662 = vadd.f32 %v661, %v535
    %v663 = vadd.f32 %v662, %v536
    %v664 = vadd.f32 %v663, %v537
    %v665 = vadd.f32 %v664, %v538
    %v666 = vadd.f32 %v665, %v539
    %v667 = vadd.f32 %v666, %v540
    %v668 = vadd.f32 %v667, %v541
    %v669 = vadd.f32 %v668, %v542
    %v670 = vadd.f32 %v669, %v543
    %v671 = vadd.f32 %v670, %v544
    %v672 = vadd.f32 %v671, %v545
    %v673 = vadd.f32 %v672, %v546
    %v674 = vadd.f32 %v673, %v547
    %v675 = vadd.f32 %v674, %v548
    %v676 = vadd.f32 %v675, %v549
    %v677 = vadd.f32 %v676, %v550
    %v678 = vadd.f32 %v677, %v551
    %v679 = vadd.f32 %v678, %v552
    %v680 = vadd.f32 %v679, %v553
    %v681 = vadd.f32 %v680, %v554
    %v682 = vadd.f32 %v681, %v555
    %v683 = vadd.f32 %v682, %v556
    %v684 = vadd.f32 %v683, %v557
    %v685 = vadd.f32 %v684, %v558
    %v686 = vadd.f32 %v685, %v559
    %v687 = vadd.f32 %v686, %v560
    %v688 = vadd.f32 %v687, %v561
    %v689 = vadd.f32 %v688, %v562
    %v690 = vadd.f32 %v689, %v563
    %v691 = vadd.f32 %v690, %v564
    %v692 = vadd.f32 %v691, %v565
    %v693 = vadd.f32 %v692, %v566
    %v694 = vadd.f32 %v693, %v567
    %v695 = vadd.f32 %v694, %v568
    %v696 = vadd.f32 %v695, %v569
    %v697 = vadd.f32 %v696, %v570
    %v698 = vadd.f32 %v697, %v571
    %v699 = vadd.f32 %v698, %v572
    %v700 = vadd.f32 %v699, %v573
    %v701 = vadd.f32 %v700, %v574
    %v702 = vadd.f32 %v701, %v575
    %v703 = vadd.f32 %v702, %v576
    %v704 = vadd.f32 %v703, %v577
    %705 = vadd.xlane.f32.xlu0 %v704
    %v706 = vpop.xlane.xlu0 %705
    %v707 = vrot.slane %v706, 4
    %v708 = vadd.f32 %v706, %v707
    %v709 = vrot.slane %v708, 2
    %v710 = vadd.f32 %v708, %v709
    %v711 = vrot.slane %v710, 1
    %v712 = vadd.f32 %v710, %v711
    %s713 = vtos %v712
    %s714 = smul.f32 %s713, 0.0005
    %v715 = vstv %s714
    %v716 = vadd.f32 %v449, %v715
    %717 = vst [vmem:[#allocation2] sm:$0xff] %v716
    %p718 = scmp.eq.s32.totalorder 0, 0
    %p719 = pnand %p718, %p60
    %p720 = pneg %p719
    // Predicated region
    $region30: #{tpu_custom_call.1} parent=1 // pred_check
      _
    $region31: #{tpu_custom_call.1} parent=1 // pred_check_branch
      %722 = sbr.rel (%p719) target = $region33
    $region32: #{tpu_custom_call.1} parent=1 // pred_region
      %v723 = vld [vmem:[#allocation2] sm:$0xff]
      %v724 = vld [vmem:[%s1] sm:$0xff]
      %v725 = vld [vmem:[%s1 + $0x8] sm:$0x3]
      %v726 = vld [vmem:[%s1 + $0x10] sm:$0xff]
      %v727 = vld [vmem:[%s1 + $0x18] sm:$0x3]
      %v728 = vmul.f32 %v724, %v724
      %v729 = vmul.f32 %v725, %v725
      %v730 = vmul.f32 %v726, %v726
      %v731 = vmul.f32 %v727, %v727
      %vm732 = vcmask 130048
      %v733 = vsel %vm732, %v728, 0.0
      %734 = vadd.xlane.f32.xlu0 %v733
      %v735 = vpop.xlane.xlu0 %734
      %vm736 = vcmask 123904
      %v737 = vsel %vm736, %v729, 0.0
      %738 = vadd.xlane.f32.xlu0 %v737
      %v739 = vpop.xlane.xlu0 %738
      %v740 = vsel %vm732, %v730, 0.0
      %741 = vadd.xlane.f32.xlu0 %v740
      %v742 = vpop.xlane.xlu0 %741
      %v743 = vsel %vm736, %v731, 0.0
      %744 = vadd.xlane.f32.xlu0 %v743
      %v745 = vpop.xlane.xlu0 %744
      %v746 = vrsqrt.pop %v735
      %v747 = vmul.f32 %v735, %v746
      %vm748 = vcmp.eq.f32.partialorder %v735, inf
      %v749 = vsel %vm748, %v735, %v747
      %vm750 = vcmp.eq.f32.partialorder %v735, 0.0
      %v751 = vand.u32 %v735, 2147483648
      %v752 = vsel %vm750, %v751, %v749
      %v753 = vrsqrt.pop %v739
      %v754 = vmul.f32 %v739, %v753
      %vm755 = vcmp.eq.f32.partialorder %v739, inf
      %v756 = vsel %vm755, %v739, %v754
      %vm757 = vcmp.eq.f32.partialorder %v739, 0.0
      %v758 = vand.u32 %v739, 2147483648
      %v759 = vsel %vm757, %v758, %v756
      %v760 = vrsqrt.pop %v742
      %v761 = vmul.f32 %v742, %v760
      %vm762 = vcmp.eq.f32.partialorder %v742, inf
      %v763 = vsel %vm762, %v742, %v761
      %vm764 = vcmp.eq.f32.partialorder %v742, 0.0
      %v765 = vand.u32 %v742, 2147483648
      %v766 = vsel %vm764, %v765, %v763
      %v767 = vrsqrt.pop %v745
      %v768 = vmul.f32 %v745, %v767
      %vm769 = vcmp.eq.f32.partialorder %v745, inf
      %v770 = vsel %vm769, %v745, %v768
      %vm771 = vcmp.eq.f32.partialorder %v745, 0.0
      %v772 = vand.u32 %v745, 2147483648
      %v773 = vsel %vm771, %v772, %v770
      %v774 = vld [vmem:[%s0] sm:$0x3]
      %v775 = vsub.f32 0.9, %v752
      %v776 = vsub.f32 0.9, %v759
      %v777 = vsub.f32 0.9, %v766
      %v778 = vsub.f32 0.9, %v773
      %v779 = vmax.f32 %v775, 0.0
      %v780 = vmax.f32 %v776, 0.0
      %v781 = vmax.f32 %v777, 0.0
      %v782 = vmax.f32 %v778, 0.0
      %v783 = vsub.f32 %v752, 0.1
      %v784 = vsub.f32 %v759, 0.1
      %v785 = vsub.f32 %v766, 0.1
      %v786 = vsub.f32 %v773, 0.1
      %v787 = vmax.f32 %v783, 0.0
      %v788 = vmax.f32 %v784, 0.0
      %v789 = vmax.f32 %v785, 0.0
      %v790 = vmax.f32 %v786, 0.0
      %v791 = vmul.f32 %v779, %v779
      %v792 = vmul.f32 %v780, %v780
      %v793 = vmul.f32 %v781, %v781
      %v794 = vmul.f32 %v782, %v782
      %v799 = vlaneseq
      %v800 = vand.u32 %v799, 127
      %v801 = vlaneseq
      %v802 = vshrl.u32 %v801, 7
      %v803 = vsub.s32 %v800, %v802
      %v804 = vrot.slane %v791, %v803
      %v805 = vadd.s32 %v800, 4294967288
      %v806 = vlaneseq
      %v807 = vshrl.u32 %v806, 7
      %v808 = vsub.s32 %v805, %v807
      %v809 = vrot.slane %v792, %v808
      %vm810 = vcmask 130112
      %v811 = vsel %vm810, %v809, %v804
      %v812 = vlaneseq
      %v813 = vshrl.u32 %v812, 7
      %v814 = vsub.s32 %v800, %v813
      %v815 = vrot.slane %v793, %v814
      %v816 = vlaneseq
      %v817 = vshrl.u32 %v816, 7
      %v818 = vsub.s32 %v805, %v817
      %v819 = vrot.slane %v794, %v818
      %v820 = vsel %vm810, %v819, %v815
      %vm821 = vcmask 1041409
      %v822 = vsel %vm821, %v820, %v811
      %v824 = vmul.f32 %v774, %v822
      %v825 = vsub.f32 1.0, %v774
      %v826 = vmul.f32 %v825, 0.5
      %v827 = vmul.f32 %v787, %v787
      %v828 = vmul.f32 %v788, %v788
      %v829 = vmul.f32 %v789, %v789
      %v830 = vmul.f32 %v790, %v790
      %v835 = vlaneseq
      %v836 = vshrl.u32 %v835, 7
      %v837 = vsub.s32 %v800, %v836
      %v838 = vrot.slane %v827, %v837
      %v839 = vlaneseq
      %v840 = vshrl.u32 %v839, 7
      %v841 = vsub.s32 %v805, %v840
      %v842 = vrot.slane %v828, %v841
      %v843 = vsel %vm810, %v842, %v838
      %v844 = vlaneseq
      %v845 = vshrl.u32 %v844, 7
      %v846 = vsub.s32 %v800, %v845
      %v847 = vrot.slane %v829, %v846
      %v848 = vlaneseq
      %v849 = vshrl.u32 %v848, 7
      %v850 = vsub.s32 %v805, %v849
      %v851 = vrot.slane %v830, %v850
      %v852 = vsel %vm810, %v851, %v847
      %v853 = vsel %vm821, %v852, %v843
      %v855 = vmul.f32 %v826, %v853
      %v856 = vadd.f32 %v824, %v855
      %vm857 = vcmask 74752
      %v858 = vsel %vm857, %v856, 0.0
      %859 = vadd.xlane.f32.xlu0 %v858
      %v860 = vpop.xlane.xlu0 %859
      %v861 = vrot.slane %v860, 4
      %v862 = vadd.f32 %v860, %v861
      %v863 = vrot.slane %v862, 2
      %v864 = vadd.f32 %v862, %v863
      %v865 = vrot.slane %v864, 1
      %v866 = vadd.f32 %v864, %v865
      %s867 = vtos %v866
      %v868 = vstv %s867
      %v869 = vadd.f32 %v723, %v868
      %870 = vst [vmem:[#allocation2] sm:$0xff] %v869
    $region33: #{tpu_custom_call.1} parent=1 // pred_fallthru
      _
    // Predicated region
    $region34: #{tpu_custom_call.1} parent=1 // pred_check
      %p871 = pneg %p60
    $region35: #{tpu_custom_call.1} parent=1 // pred_check_branch
      %873 = sbr.rel (%p871) target = $region37
    $region36: #{tpu_custom_call.1} parent=1 // pred_region
      %v874 = vld [vmem:[#allocation2] sm:$0xff]
      %v875 = vmul.f32 %v874, 0.5
      %876 = vst [vmem:[#allocation8] sm:$0xff] %v875
    $region37: #{tpu_custom_call.1} parent=1 // pred_fallthru
      _
    // Predicated region
    $region38: #{tpu_custom_call.1} parent=1 // pred_check
      _
    $region39: #{tpu_custom_call.1} parent=1 // pred_check_branch
      %878 = sbr.rel (0) target = $region41
    $region40: #{tpu_custom_call.1} parent=1 // pred_region
      %s880 = ssub.s32 128, 128
      %881 = vsyncadd [#allocation5], %s880
      %s883 = sshll.u32 [#allocation8], 4
      %s884 = int_to_ptr.vmem [resolvable:$true] %s883
      %886 = dma.vmem_to_hbm [thread:$0]  %s884, 128, %s4, [#allocation5]
    $region41: #{tpu_custom_call.1} parent=1 // pred_fallthru
      _
    // Predicated region
    $region42: #{tpu_custom_call.1} parent=1 // pred_check
      _
    $region43: #{tpu_custom_call.1} parent=1 // pred_check_branch
      %888 = sbr.rel (0) target = $region45
    $region44: #{tpu_custom_call.1} parent=1 // pred_region
      %889 = dma.done [#allocation5], 128
    $region45: #{tpu_custom_call.1} parent=1 // pred_fallthru
      _
    %890 = vsyncpa [#allocation4], 1
    %891 = vsyncpa [#allocation7], 1
    %892 = vsyncpa [#allocation5], 1

</llo_original>
